<compile_context>
chip_gen: v7x
topology: tpu7x:2x2x1
jax: 0.10.0
libtpu: 0.0.40
codegen_flags: <defaults>
</compile_context>

<pallas_src>
import jax
import jax.numpy as jnp
from jax.experimental import pallas as pl
from jax.experimental.pallas import tpu as pltpu

KAPPA = 8
BATCH_SIZE = 10
HIDDEN_SIZE = 64
INPUT_SIZE = (KAPPA + 1) * 2 + 1 + BATCH_SIZE * 9  # = 109
OUTPUT_SIZE = 1

LANE = 128
H1 = 2 * HIDDEN_SIZE      # 128 (already lane aligned)
H2 = HIDDEN_SIZE          # 64
IN_PAD = LANE             # 109 -> 128
H2_PAD = LANE             # 64  -> 128
MAX_TILE = 512            # batch (lane) tile for large batches


def _round_up(n, m):
    return ((n + m - 1) // m) * m


def critic_kernel(x_ref, w1_ref, w2_ref, slab_ref, o_ref):
    # x_ref:    (128, TB)  f32   transposed input: features on sublanes, batch on lanes
    # w1_ref:   (128, 128) bf16  W1.T, zero-padded on the input-feature dim
    # w2_ref:   (128, 128) bf16  W2.T, zero-padded on the output dim (64 -> 128)
    # slab_ref: (128, 4)   f32   col0 = b1, col1 = b2 (padded), col2 = w3 (padded), [0,3] = b3
    # o_ref:    (1, TB)    f32   lane-dense output row for this tile
    x = x_ref[...].astype(jnp.bfloat16)       # f32 -> bf16 cast rides the VPU
    b1 = slab_ref[:, 0:1]                     # (128, 1)
    b2 = slab_ref[:, 1:2]                     # (128, 1)
    w3 = slab_ref[:, 2:3]                     # (128, 1)
    b3 = slab_ref[0:1, 3:4]                   # (1, 1)

    h1 = jnp.tanh(
        jnp.dot(w1_ref[...], x, preferred_element_type=jnp.float32) + b1
    )                                          # (128, TB) f32
    h2 = jnp.tanh(
        jnp.dot(w2_ref[...], h1.astype(jnp.bfloat16),
                preferred_element_type=jnp.float32) + b2
    )                                          # (128, TB) f32
    # Final (128 -> 1) projection: VPU multiply + sublane reduce, b3 folded in.
    # Result is a lane-dense (1, TB) row.
    o_ref[...] = jnp.sum(h2 * w3, axis=0, keepdims=True) + b3


def pack_params(params):
    """Pre-pad / pre-cast the parameters once (all padding is exactly zero)."""
    w1, b1, w2, b2, w3, b3 = params
    # Transposed weights (output dim on sublanes, contraction dim on lanes).
    w1t = (jnp.zeros((H1, IN_PAD), jnp.float32)
           .at[:, :INPUT_SIZE].set(w1.T)).astype(jnp.bfloat16)        # (128,128) bf16
    w2t = (jnp.zeros((H2_PAD, H1), jnp.float32)
           .at[:H2, :].set(w2.T)).astype(jnp.bfloat16)                # (128,128) bf16
    # One small f32 slab for every remaining parameter.
    slab = jnp.zeros((IN_PAD, 4), jnp.float32)
    slab = slab.at[:H1, 0].set(b1.reshape(H1))
    slab = slab.at[:H2, 1].set(b2.reshape(H2))
    slab = slab.at[:H2, 2].set(w3.reshape(H2))
    slab = slab.at[0, 3].set(b3.reshape(()))
    return w1t, w2t, slab


@jax.jit
def critic_forward(x, w1t, w2t, slab):
    """x: (batch, 109) float32; returns (batch, 1) float32."""
    batch = x.shape[0]
    bp = _round_up(max(batch, LANE), LANE)           # lane-align the batch
    tb = bp if bp <= MAX_TILE else MAX_TILE          # >=512-wide tiles at large batch
    padded = _round_up(bp, tb)
    grid = (padded // tb,)

    # Pad + transpose once (f32, fused under jit); bf16 cast happens in the kernel.
    xt = (jnp.zeros((IN_PAD, padded), jnp.float32)
          .at[:INPUT_SIZE, :batch].set(x.T))

    resident = lambda i: (0, 0)                      # weights stay VMEM-resident
    out = pl.pallas_call(
        critic_kernel,
        out_shape=jax.ShapeDtypeStruct((1, padded), jnp.float32),
        grid=grid,
        in_specs=[
            pl.BlockSpec((IN_PAD, tb), lambda i: (0, i)),     # x tile (batch on lanes)
            pl.BlockSpec((H1, IN_PAD), resident),             # W1.T
            pl.BlockSpec((H2_PAD, H1), resident),             # W2.T
            pl.BlockSpec((IN_PAD, 4), resident),              # bias/w3/b3 slab
        ],
        out_specs=pl.BlockSpec((1, tb), lambda i: (0, i)),    # lane-dense output row
        compiler_params=pltpu.CompilerParams(
            dimension_semantics=("parallel",)),               # megacore batch split
    )(xt, w1t, w2t, slab)
    return out[0, :batch].reshape(batch, OUTPUT_SIZE)


def init_params(key):
    """Deterministic init mirroring torch.nn.Linear default (U[-1/sqrt(fan_in), +1/sqrt(fan_in)])."""
    dims = [(INPUT_SIZE, H1), (H1, H2), (H2, OUTPUT_SIZE)]
    params = []
    for (fan_in, fan_out) in dims:
        key, kw, kb = jax.random.split(key, 3)
        bound = 1.0 / jnp.sqrt(fan_in)
        w = jax.random.uniform(kw, (fan_in, fan_out), jnp.float32, -bound, bound)
        b = jax.random.uniform(kb, (1, fan_out), jnp.float32, -bound, bound)
        params.extend([w, b])
    return tuple(params)


def reference_forward(x, params):
    w1, b1, w2, b2, w3, b3 = params
    h1 = jnp.tanh(x @ w1 + b1)
    h2 = jnp.tanh(h1 @ w2 + b2)
    return h2 @ w3 + b3


if __name__ == "__main__":
    key = jax.random.PRNGKey(0)
    key, kx1, kx2 = jax.random.split(key, 3)

    params = init_params(key)
    packed = pack_params(params)

    # Small batch (single tile, grid=(1,)).
    x_small = jax.random.normal(kx1, (8, INPUT_SIZE), jnp.float32)
    out_small = jax.block_until_ready(critic_forward(x_small, *packed))
    ref_small = reference_forward(x_small, params)
    assert out_small.shape == (8, OUTPUT_SIZE)
    assert jnp.allclose(out_small, ref_small, atol=3e-2, rtol=3e-2), (
        f"max abs err = {float(jnp.max(jnp.abs(out_small - ref_small)))}")

    # Larger batch exercising the multi-tile grid / parallel path (grid=(2,)).
    x_big = jax.random.normal(kx2, (1000, INPUT_SIZE), jnp.float32)
    out_big = jax.block_until_ready(critic_forward(x_big, *packed))
    ref_big = reference_forward(x_big, params)
    assert out_big.shape == (1000, OUTPUT_SIZE)
    assert jnp.allclose(out_big, ref_big, atol=3e-2, rtol=3e-2), (
        f"max abs err = {float(jnp.max(jnp.abs(out_big - ref_big)))}")

    print("KERNEL_OK")
</pallas_src>

<mosaic_0001>
module attributes {stable_mosaic.version = 11 : i64} {
  func.func @critic_kernel(%arg0: i32, %arg1: memref<128x128xf32, #tpu.memory_space<vmem>>, %arg2: memref<128x128xbf16, #tpu.memory_space<vmem>>, %arg3: memref<128x128xbf16, #tpu.memory_space<vmem>>, %arg4: memref<128x4xf32, #tpu.memory_space<vmem>>, %arg5: memref<1x128xf32, #tpu.memory_space<vmem>>) attributes {dimension_semantics = [#tpu.dimension_semantics<parallel>], iteration_bounds = array<i64: 1>, scalar_prefetch = 0 : i64, scratch_operands = 0 : i64, tpu.core_type = #tpu.core_type<tc>, window_params = [{transform_indices = @transform_0, window_bounds = array<i64: 128, 128>}, {pipeline_mode = #tpu.pipeline_mode<synchronous>, transform_indices = @transform_1, window_bounds = array<i64: 128, 128>}, {pipeline_mode = #tpu.pipeline_mode<synchronous>, transform_indices = @transform_2, window_bounds = array<i64: 128, 128>}, {pipeline_mode = #tpu.pipeline_mode<synchronous>, transform_indices = @transform_3, window_bounds = array<i64: 128, 4>}, {transform_indices = @transform_4, window_bounds = array<i64: 1, 128>}]} {
    %c0 = arith.constant 0 : index
    %c0_0 = arith.constant 0 : index
    %0 = vector.load %arg1[%c0, %c0_0] : memref<128x128xf32, #tpu.memory_space<vmem>>, vector<128x128xf32>
    %1 = arith.truncf %0 : vector<128x128xf32> to vector<128x128xbf16>
    %c0_1 = arith.constant 0 : index
    %c0_2 = arith.constant 0 : index
    %2 = vector.load %arg4[%c0_1, %c0_2] : memref<128x4xf32, #tpu.memory_space<vmem>>, vector<128x1xf32>
    %c0_3 = arith.constant 0 : index
    %c1 = arith.constant 1 : index
    %3 = vector.load %arg4[%c0_3, %c1] : memref<128x4xf32, #tpu.memory_space<vmem>>, vector<128x1xf32>
    %c0_4 = arith.constant 0 : index
    %c2 = arith.constant 2 : index
    %4 = vector.load %arg4[%c0_4, %c2] : memref<128x4xf32, #tpu.memory_space<vmem>>, vector<128x1xf32>
    %c0_5 = arith.constant 0 : index
    %c3 = arith.constant 3 : index
    %5 = vector.load %arg4[%c0_5, %c3] : memref<128x4xf32, #tpu.memory_space<vmem>>, vector<1x1xf32>
    %c0_6 = arith.constant 0 : index
    %c0_7 = arith.constant 0 : index
    %6 = vector.load %arg2[%c0_6, %c0_7] : memref<128x128xbf16, #tpu.memory_space<vmem>>, vector<128x128xbf16>
    %cst = arith.constant dense<0.000000e+00> : vector<128x128xf32>
    %7 = tpu.matmul %6, %1, %cst {dimension_numbers = #tpu.dot_dimension_numbers<[1], [0], [0], [1], [0, 0, 1, 1], [], []>} : vector<128x128xbf16>, vector<128x128xbf16>, vector<128x128xf32> -> vector<128x128xf32>
    %8 = vector.broadcast %2 : vector<128x1xf32> to vector<128x128xf32>
    %9 = arith.addf %7, %8 : vector<128x128xf32>
    %10 = math.tanh %9 : vector<128x128xf32>
    %c0_8 = arith.constant 0 : index
    %c0_9 = arith.constant 0 : index
    %11 = vector.load %arg3[%c0_8, %c0_9] : memref<128x128xbf16, #tpu.memory_space<vmem>>, vector<128x128xbf16>
    %12 = arith.truncf %10 : vector<128x128xf32> to vector<128x128xbf16>
    %cst_10 = arith.constant dense<0.000000e+00> : vector<128x128xf32>
    %13 = tpu.matmul %11, %12, %cst_10 {dimension_numbers = #tpu.dot_dimension_numbers<[1], [0], [0], [1], [0, 0, 1, 1], [], []>} : vector<128x128xbf16>, vector<128x128xbf16>, vector<128x128xf32> -> vector<128x128xf32>
    %14 = vector.broadcast %3 : vector<128x1xf32> to vector<128x128xf32>
    %15 = arith.addf %13, %14 : vector<128x128xf32>
    %16 = math.tanh %15 : vector<128x128xf32>
    %17 = vector.broadcast %4 : vector<128x1xf32> to vector<128x128xf32>
    %18 = arith.mulf %16, %17 : vector<128x128xf32>
    %cst_11 = arith.constant dense<0.000000e+00> : vector<128xf32>
    %19 = vector.multi_reduction <add>, %18, %cst_11 [0] : vector<128x128xf32> to vector<128xf32>
    %20 = vector.shape_cast %19 : vector<128xf32> to vector<1x128xf32>
    %21 = vector.broadcast %5 : vector<1x1xf32> to vector<1x128xf32>
    %22 = arith.addf %20, %21 : vector<1x128xf32>
    %c0_12 = arith.constant 0 : index
    %c0_13 = arith.constant 0 : index
    %23 = vector.load %arg5[%c0_12, %c0_13] : memref<1x128xf32, #tpu.memory_space<vmem>>, vector<1x128xf32>
    tpu.vector_store %arg5[%c0_12, %c0_13], %22 {strides = array<i32>} : memref<1x128xf32, #tpu.memory_space<vmem>>, vector<1x128xf32>,
    return
  }
  func.func @transform_0(%arg0: i32) -> (i32, i32) {
    %c0_i32 = arith.constant 0 : i32
    %c0_i32_0 = arith.constant 0 : i32
    return %c0_i32, %arg0 : i32, i32
  }
  func.func @transform_1(%arg0: i32) -> (i32, i32) {
    %c0_i32 = arith.constant 0 : i32
    %c0_i32_0 = arith.constant 0 : i32
    %c0_i32_1 = arith.constant 0 : i32
    return %c0_i32, %c0_i32_0 : i32, i32
  }
  func.func @transform_2(%arg0: i32) -> (i32, i32) {
    %c0_i32 = arith.constant 0 : i32
    %c0_i32_0 = arith.constant 0 : i32
    %c0_i32_1 = arith.constant 0 : i32
    return %c0_i32, %c0_i32_0 : i32, i32
  }
  func.func @transform_3(%arg0: i32) -> (i32, i32) {
    %c0_i32 = arith.constant 0 : i32
    %c0_i32_0 = arith.constant 0 : i32
    %c0_i32_1 = arith.constant 0 : i32
    return %c0_i32, %c0_i32_0 : i32, i32
  }
  func.func @transform_4(%arg0: i32) -> (i32, i32) {
    %c0_i32 = arith.constant 0 : i32
    %c0_i32_0 = arith.constant 0 : i32
    return %c0_i32, %arg0 : i32, i32
  }
}

</mosaic_0001>

<llo_original>
// kernel: critic_forward.1
$region0: #{critic_forward.1}
  #allocation0 [shape = 'u32[]', space=smem, size = 0x4, offset = 0x4, fixed_abs, tag = 'smem constant byte address 0x4 - core index']
  #allocation1 [shape = 'u32[144,128]{1,0:T(1,128)}', space=vmem, size = 0x12000, scoped, tag = 'internal scratch']
  %s0 = inlined_call_operand.vmem [shape: f32[128,128], index: 0, kind: input, shape index: {}]
  %s1 = inlined_call_operand.vmem [shape: bf16[128,128], index: 1, kind: input, shape index: {}]
  %s2 = inlined_call_operand.vmem [shape: bf16[128,128], index: 2, kind: input, shape index: {}]
  %s3 = inlined_call_operand.vmem [shape: f32[128,4], index: 3, kind: input, shape index: {}]
  %s4 = inlined_call_operand.vmem [shape: f32[1,128], index: 4, kind: output, shape index: {}]
  %s5 = sld [smem:[#allocation0]]
  $region26: #{critic_forward.1} parent=0
    _
  %s7 = ssub.s32 1, %s5
  %s8 = scalar_select 0, %s7, %s5
  // Predicated region
  $region2: #{critic_forward.1} parent=0 // pred_check
    _
  $region3: #{critic_forward.1} parent=0 // pred_check_branch
    %10 = sbr.rel (0) target = $region5
  $region4: #{critic_forward.1} parent=0 // pred_region
    _
  $region5: #{critic_forward.1} parent=0 // pred_fallthru
    _
  // Predicated region
  $region6: #{critic_forward.1} parent=0 // pred_check
    _
  $region7: #{critic_forward.1} parent=0 // pred_check_branch
    %12 = sbr.rel (0) target = $region9
  $region8: #{critic_forward.1} parent=0 // pred_region
    _
  $region9: #{critic_forward.1} parent=0 // pred_fallthru
    _
  // Predicated region
  $region10: #{critic_forward.1} parent=0 // pred_check
    _
  $region11: #{critic_forward.1} parent=0 // pred_check_branch
    %14 = sbr.rel (0) target = $region13
  $region12: #{critic_forward.1} parent=0 // pred_region
    _
  $region13: #{critic_forward.1} parent=0 // pred_fallthru
    _
  // Predicated region
  $region14: #{critic_forward.1} parent=0 // pred_check
    _
  $region15: #{critic_forward.1} parent=0 // pred_check_branch
    %16 = sbr.rel (0) target = $region17
  $region16: #{critic_forward.1} parent=0 // pred_region
    _
  $region17: #{critic_forward.1} parent=0 // pred_fallthru
    _
  %v18 = vld [vmem:[%s0] sm:$0xff]
  %v19 = vld [vmem:[%s0 + $0x8] sm:$0xff]
  %v20 = vld [vmem:[%s0 + $0x10] sm:$0xff]
  %v21 = vld [vmem:[%s0 + $0x18] sm:$0xff]
  %v22 = vld [vmem:[%s0 + $0x20] sm:$0xff]
  %v23 = vld [vmem:[%s0 + $0x28] sm:$0xff]
  %v24 = vld [vmem:[%s0 + $0x30] sm:$0xff]
  %v25 = vld [vmem:[%s0 + $0x38] sm:$0xff]
  %v26 = vld [vmem:[%s0 + $0x40] sm:$0xff]
  %v27 = vld [vmem:[%s0 + $0x48] sm:$0xff]
  %v28 = vld [vmem:[%s0 + $0x50] sm:$0xff]
  %v29 = vld [vmem:[%s0 + $0x58] sm:$0xff]
  %v30 = vld [vmem:[%s0 + $0x60] sm:$0xff]
  %v31 = vld [vmem:[%s0 + $0x68] sm:$0xff]
  %v32 = vld [vmem:[%s0 + $0x70] sm:$0xff]
  %v33 = vld [vmem:[%s0 + $0x78] sm:$0xff]
  %v34 = vpack.c.bf16 %v19, %v18
  %v35 = vpack.c.bf16 %v21, %v20
  %v36 = vpack.c.bf16 %v23, %v22
  %v37 = vpack.c.bf16 %v25, %v24
  %v38 = vpack.c.bf16 %v27, %v26
  %v39 = vpack.c.bf16 %v29, %v28
  %v40 = vpack.c.bf16 %v31, %v30
  %v41 = vpack.c.bf16 %v33, %v32
  %v42 = vld [vmem:[%s3] sm:$0xff]
  %v43 = vld [vmem:[%s3 + $0x8] sm:$0xff]
  %v44 = vld [vmem:[%s3 + $0x10] sm:$0xff]
  %v45 = vld [vmem:[%s3 + $0x18] sm:$0xff]
  %v46 = vld [vmem:[%s3 + $0x20] sm:$0xff]
  %v47 = vld [vmem:[%s3 + $0x28] sm:$0xff]
  %v48 = vld [vmem:[%s3 + $0x30] sm:$0xff]
  %v49 = vld [vmem:[%s3 + $0x38] sm:$0xff]
  %v50 = vld [vmem:[%s3 + $0x40] sm:$0xff]
  %v51 = vld [vmem:[%s3 + $0x48] sm:$0xff]
  %v52 = vld [vmem:[%s3 + $0x50] sm:$0xff]
  %v53 = vld [vmem:[%s3 + $0x58] sm:$0xff]
  %v54 = vld [vmem:[%s3 + $0x60] sm:$0xff]
  %v55 = vld [vmem:[%s3 + $0x68] sm:$0xff]
  %v56 = vld [vmem:[%s3 + $0x70] sm:$0xff]
  %v57 = vld [vmem:[%s3 + $0x78] sm:$0xff]
  %v58 = vld [vmem:[%s3] sm:$0x1]
  %v59 = vld [vmem:[%s1] sm:$0xf]
  %v60 = vld [vmem:[%s1 + $0x4] sm:$0xf]
  %v61 = vld [vmem:[%s1 + $0x8] sm:$0xf]
  %v62 = vld [vmem:[%s1 + $0xc] sm:$0xf]
  %v63 = vld [vmem:[%s1 + $0x10] sm:$0xf]
  %v64 = vld [vmem:[%s1 + $0x14] sm:$0xf]
  %v65 = vld [vmem:[%s1 + $0x18] sm:$0xf]
  %v66 = vld [vmem:[%s1 + $0x1c] sm:$0xf]
  %v67 = vld [vmem:[%s1 + $0x20] sm:$0xf]
  %v68 = vld [vmem:[%s1 + $0x24] sm:$0xf]
  %v69 = vld [vmem:[%s1 + $0x28] sm:$0xf]
  %v70 = vld [vmem:[%s1 + $0x2c] sm:$0xf]
  %v71 = vld [vmem:[%s1 + $0x30] sm:$0xf]
  %v72 = vld [vmem:[%s1 + $0x34] sm:$0xf]
  %v73 = vld [vmem:[%s1 + $0x38] sm:$0xf]
  %v74 = vld [vmem:[%s1 + $0x3c] sm:$0xf]
  %76 = vset.pattern.permute.xlu0 0
  %77 = vperm.xlu0 %76, %v42
  %v78 = vpop.permute.xlu0 %77
  %81 = vset.pattern.permute.xlu0 0
  %82 = vperm.xlu0 %81, %v43
  %v83 = vpop.permute.xlu0 %82
  %86 = vset.pattern.permute.xlu0 0
  %87 = vperm.xlu0 %86, %v44
  %v88 = vpop.permute.xlu0 %87
  %91 = vset.pattern.permute.xlu0 0
  %92 = vperm.xlu0 %91, %v45
  %v93 = vpop.permute.xlu0 %92
  %96 = vset.pattern.permute.xlu0 0
  %97 = vperm.xlu0 %96, %v46
  %v98 = vpop.permute.xlu0 %97
  %101 = vset.pattern.permute.xlu0 0
  %102 = vperm.xlu0 %101, %v47
  %v103 = vpop.permute.xlu0 %102
  %106 = vset.pattern.permute.xlu0 0
  %107 = vperm.xlu0 %106, %v48
  %v108 = vpop.permute.xlu0 %107
  %111 = vset.pattern.permute.xlu0 0
  %112 = vperm.xlu0 %111, %v49
  %v113 = vpop.permute.xlu0 %112
  %116 = vset.pattern.permute.xlu0 0
  %117 = vperm.xlu0 %116, %v50
  %v118 = vpop.permute.xlu0 %117
  %121 = vset.pattern.permute.xlu0 0
  %122 = vperm.xlu0 %121, %v51
  %v123 = vpop.permute.xlu0 %122
  %126 = vset.pattern.permute.xlu0 0
  %127 = vperm.xlu0 %126, %v52
  %v128 = vpop.permute.xlu0 %127
  %131 = vset.pattern.permute.xlu0 0
  %132 = vperm.xlu0 %131, %v53
  %v133 = vpop.permute.xlu0 %132
  %136 = vset.pattern.permute.xlu0 0
  %137 = vperm.xlu0 %136, %v54
  %v138 = vpop.permute.xlu0 %137
  %141 = vset.pattern.permute.xlu0 0
  %142 = vperm.xlu0 %141, %v55
  %v143 = vpop.permute.xlu0 %142
  %146 = vset.pattern.permute.xlu0 0
  %147 = vperm.xlu0 %146, %v56
  %v148 = vpop.permute.xlu0 %147
  %151 = vset.pattern.permute.xlu0 0
  %152 = vperm.xlu0 %151, %v57
  %v153 = vpop.permute.xlu0 %152
  %v171 = vunpack.c.l.b16 %v59
  %v172 = vunpack.c.l.b16 %v60
  %v173 = vunpack.c.l.b16 %v61
  %v174 = vunpack.c.l.b16 %v62
  %v175 = vunpack.c.l.b16 %v63
  %v176 = vunpack.c.l.b16 %v64
  %v177 = vunpack.c.l.b16 %v65
  %v178 = vunpack.c.l.b16 %v66
  %v179 = vunpack.c.l.b16 %v67
  %v180 = vunpack.c.l.b16 %v68
  %v181 = vunpack.c.l.b16 %v69
  %v182 = vunpack.c.l.b16 %v70
  %v183 = vunpack.c.l.b16 %v71
  %v184 = vunpack.c.l.b16 %v72
  %v185 = vunpack.c.l.b16 %v73
  %v186 = vunpack.c.l.b16 %v74
  %v187 = vpack.c.b16 %v172, %v171
  %v188 = vpack.c.b16 %v174, %v173
  %v189 = vpack.c.b16 %v176, %v175
  %v190 = vpack.c.b16 %v178, %v177
  %v191 = vpack.c.b16 %v180, %v179
  %v192 = vpack.c.b16 %v182, %v181
  %v193 = vpack.c.b16 %v184, %v183
  %v194 = vpack.c.b16 %v186, %v185
  %203 = vmatprep.subr.bf16.mxu0 0
  %204 = vmatpush1.bf16.msra.mxu0 %v34
  %205 = vmatprep.subr.bf16.mxu0 0
  %206 = vmatpush1.bf16.msra.mxu0 %v35
  %207 = vmatprep.subr.bf16.mxu0 0
  %208 = vmatpush1.bf16.msra.mxu0 %v36
  %209 = vmatprep.subr.bf16.mxu0 0
  %210 = vmatpush1.bf16.msra.mxu0 %v37
  %211 = vmatprep.subr.bf16.mxu0 0
  %212 = vmatpush1.bf16.msra.mxu0 %v38
  %213 = vmatprep.subr.bf16.mxu0 0
  %214 = vmatpush1.bf16.msra.mxu0 %v39
  %215 = vmatprep.subr.bf16.mxu0 0
  %216 = vmatpush1.bf16.msra.mxu0 %v40
  %217 = vmatprep.subr.bf16.mxu0 0
  %218 = vmatpush1.bf16.msra.mxu0 %v41
  %219 = vmatprep.subr.bf16.mxu0 0
  %220 = vmatpush1.bf16.msra.mxu0 0
  %221 = vmatprep.subr.bf16.mxu0 0
  %222 = vmatpush1.bf16.msra.mxu0 0
  %223 = vmatprep.subr.bf16.mxu0 0
  %224 = vmatpush1.bf16.msra.mxu0 0
  %225 = vmatprep.subr.bf16.mxu0 0
  %226 = vmatpush1.bf16.msra.mxu0 0
  %227 = vmatprep.subr.bf16.mxu0 0
  %228 = vmatpush1.bf16.msra.mxu0 0
  %229 = vmatprep.subr.bf16.mxu0 0
  %230 = vmatpush1.bf16.msra.mxu0 0
  %231 = vmatprep.subr.bf16.mxu0 0
  %232 = vmatpush1.bf16.msra.mxu0 0
  %233 = vmatprep.subr.bf16.mxu0 0
  %234 = vmatpush1.bf16.msra.mxu0 0
  %235 = vmatprep.mubr.bf16.mxu0 0
  %236 = vmatmul.mubr.bf16.gmra.mrb[0].mxu0 %v187
  %v237 = vpop.f32.mrb[0].mxu0
  %v238 = vadd.f32 %v78, %v237
  %v239 = vpop.f32.mrb[0].mxu0
  %v240 = vpop.f32.mrb[0].mxu0
  %v241 = vadd.f32 %v83, %v240
  %v242 = vpop.f32.mrb[0].mxu0
  %243 = vmatprep.mubr.bf16.mxu0 0
  %244 = vmatmul.mubr.bf16.gmra.mrb[0].mxu0 %v188
  %v245 = vpop.f32.mrb[0].mxu0
  %v246 = vadd.f32 %v88, %v245
  %v247 = vpop.f32.mrb[0].mxu0
  %v248 = vpop.f32.mrb[0].mxu0
  %v249 = vadd.f32 %v93, %v248
  %v250 = vpop.f32.mrb[0].mxu0
  %251 = vmatprep.mubr.bf16.mxu0 0
  %252 = vmatmul.mubr.bf16.gmra.mrb[0].mxu0 %v189
  %v253 = vpop.f32.mrb[0].mxu0
  %v254 = vadd.f32 %v98, %v253
  %v255 = vpop.f32.mrb[0].mxu0
  %v256 = vpop.f32.mrb[0].mxu0
  %v257 = vadd.f32 %v103, %v256
  %v258 = vpop.f32.mrb[0].mxu0
  %259 = vmatprep.mubr.bf16.mxu0 0
  %260 = vmatmul.mubr.bf16.gmra.mrb[0].mxu0 %v190
  %v261 = vpop.f32.mrb[0].mxu0
  %v262 = vadd.f32 %v108, %v261
  %v263 = vpop.f32.mrb[0].mxu0
  %v264 = vpop.f32.mrb[0].mxu0
  %v265 = vadd.f32 %v113, %v264
  %v266 = vpop.f32.mrb[0].mxu0
  %267 = vmatprep.mubr.bf16.mxu0 0
  %268 = vmatmul.mubr.bf16.gmra.mrb[0].mxu0 %v191
  %v269 = vpop.f32.mrb[0].mxu0
  %v270 = vadd.f32 %v118, %v269
  %v271 = vpop.f32.mrb[0].mxu0
  %v272 = vpop.f32.mrb[0].mxu0
  %v273 = vadd.f32 %v123, %v272
  %v274 = vpop.f32.mrb[0].mxu0
  %275 = vmatprep.mubr.bf16.mxu0 0
  %276 = vmatmul.mubr.bf16.gmra.mrb[0].mxu0 %v192
  %v277 = vpop.f32.mrb[0].mxu0
  %v278 = vadd.f32 %v128, %v277
  %v279 = vpop.f32.mrb[0].mxu0
  %v280 = vpop.f32.mrb[0].mxu0
  %v281 = vadd.f32 %v133, %v280
  %v282 = vpop.f32.mrb[0].mxu0
  %283 = vmatprep.mubr.bf16.mxu0 0
  %284 = vmatmul.mubr.bf16.gmra.mrb[0].mxu0 %v193
  %v285 = vpop.f32.mrb[0].mxu0
  %v286 = vadd.f32 %v138, %v285
  %v287 = vpop.f32.mrb[0].mxu0
  %v288 = vpop.f32.mrb[0].mxu0
  %v289 = vadd.f32 %v143, %v288
  %v290 = vpop.f32.mrb[0].mxu0
  %291 = vmatprep.mubr.bf16.mxu0 0
  %292 = vmatmul.mubr.bf16.gmra.mrb[0].mxu0 %v194
  %v293 = vpop.f32.mrb[0].mxu0
  %v294 = vadd.f32 %v148, %v293
  %v295 = vpop.f32.mrb[0].mxu0
  %v296 = vpop.f32.mrb[0].mxu0
  %v297 = vadd.f32 %v153, %v296
  %v298 = vpop.f32.mrb[0].mxu0
  %299 = vdwg.mxu0
  %v300 = vtanh.pop %v238
  %v301 = vtanh.pop %v241
  %v302 = vtanh.pop %v246
  %v303 = vtanh.pop %v249
  %v304 = vtanh.pop %v254
  %v305 = vtanh.pop %v257
  %v306 = vtanh.pop %v262
  %v307 = vtanh.pop %v265
  %v308 = vtanh.pop %v270
  %v309 = vtanh.pop %v273
  %v310 = vtanh.pop %v278
  %v311 = vtanh.pop %v281
  %v312 = vtanh.pop %v286
  %v313 = vtanh.pop %v289
  %v314 = vtanh.pop %v294
  %v315 = vtanh.pop %v297
  %v316 = vld [vmem:[%s2] sm:$0xf]
  %v317 = vld [vmem:[%s2 + $0x4] sm:$0xf]
  %v318 = vld [vmem:[%s2 + $0x8] sm:$0xf]
  %v319 = vld [vmem:[%s2 + $0xc] sm:$0xf]
  %v320 = vld [vmem:[%s2 + $0x10] sm:$0xf]
  %v321 = vld [vmem:[%s2 + $0x14] sm:$0xf]
  %v322 = vld [vmem:[%s2 + $0x18] sm:$0xf]
  %v323 = vld [vmem:[%s2 + $0x1c] sm:$0xf]
  %v324 = vld [vmem:[%s2 + $0x20] sm:$0xf]
  %v325 = vld [vmem:[%s2 + $0x24] sm:$0xf]
  %v326 = vld [vmem:[%s2 + $0x28] sm:$0xf]
  %v327 = vld [vmem:[%s2 + $0x2c] sm:$0xf]
  %v328 = vld [vmem:[%s2 + $0x30] sm:$0xf]
  %v329 = vld [vmem:[%s2 + $0x34] sm:$0xf]
  %v330 = vld [vmem:[%s2 + $0x38] sm:$0xf]
  %v331 = vld [vmem:[%s2 + $0x3c] sm:$0xf]
  %v332 = vpack.c.bf16 %v301, %v300
  %v333 = vpack.c.bf16 %v303, %v302
  %v334 = vpack.c.bf16 %v305, %v304
  %v335 = vpack.c.bf16 %v307, %v306
  %v336 = vpack.c.bf16 %v309, %v308
  %v337 = vpack.c.bf16 %v311, %v310
  %v338 = vpack.c.bf16 %v313, %v312
  %v339 = vpack.c.bf16 %v315, %v314
  %340 = vset.pattern.permute.xlu0 1
  %341 = vperm.xlu0 %340, %v42
  %v342 = vpop.permute.xlu0 %341
  %344 = vset.pattern.permute.xlu0 1
  %345 = vperm.xlu0 %344, %v43
  %v346 = vpop.permute.xlu0 %345
  %348 = vset.pattern.permute.xlu0 1
  %349 = vperm.xlu0 %348, %v44
  %v350 = vpop.permute.xlu0 %349
  %352 = vset.pattern.permute.xlu0 1
  %353 = vperm.xlu0 %352, %v45
  %v354 = vpop.permute.xlu0 %353
  %356 = vset.pattern.permute.xlu0 1
  %357 = vperm.xlu0 %356, %v46
  %v358 = vpop.permute.xlu0 %357
  %360 = vset.pattern.permute.xlu0 1
  %361 = vperm.xlu0 %360, %v47
  %v362 = vpop.permute.xlu0 %361
  %364 = vset.pattern.permute.xlu0 1
  %365 = vperm.xlu0 %364, %v48
  %v366 = vpop.permute.xlu0 %365
  %368 = vset.pattern.permute.xlu0 1
  %369 = vperm.xlu0 %368, %v49
  %v370 = vpop.permute.xlu0 %369
  %372 = vset.pattern.permute.xlu0 1
  %373 = vperm.xlu0 %372, %v50
  %v374 = vpop.permute.xlu0 %373
  %376 = vset.pattern.permute.xlu0 1
  %377 = vperm.xlu0 %376, %v51
  %v378 = vpop.permute.xlu0 %377
  %380 = vset.pattern.permute.xlu0 1
  %381 = vperm.xlu0 %380, %v52
  %v382 = vpop.permute.xlu0 %381
  %384 = vset.pattern.permute.xlu0 1
  %385 = vperm.xlu0 %384, %v53
  %v386 = vpop.permute.xlu0 %385
  %388 = vset.pattern.permute.xlu0 1
  %389 = vperm.xlu0 %388, %v54
  %v390 = vpop.permute.xlu0 %389
  %392 = vset.pattern.permute.xlu0 1
  %393 = vperm.xlu0 %392, %v55
  %v394 = vpop.permute.xlu0 %393
  %396 = vset.pattern.permute.xlu0 1
  %397 = vperm.xlu0 %396, %v56
  %v398 = vpop.permute.xlu0 %397
  %400 = vset.pattern.permute.xlu0 1
  %401 = vperm.xlu0 %400, %v57
  %v402 = vpop.permute.xlu0 %401
  %v420 = vunpack.c.l.b16 %v316
  %v421 = vunpack.c.l.b16 %v317
  %v422 = vunpack.c.l.b16 %v318
  %v423 = vunpack.c.l.b16 %v319
  %v424 = vunpack.c.l.b16 %v320
  %v425 = vunpack.c.l.b16 %v321
  %v426 = vunpack.c.l.b16 %v322
  %v427 = vunpack.c.l.b16 %v323
  %v428 = vunpack.c.l.b16 %v324
  %v429 = vunpack.c.l.b16 %v325
  %v430 = vunpack.c.l.b16 %v326
  %v431 = vunpack.c.l.b16 %v327
  %v432 = vunpack.c.l.b16 %v328
  %v433 = vunpack.c.l.b16 %v329
  %v434 = vunpack.c.l.b16 %v330
  %v435 = vunpack.c.l.b16 %v331
  %v436 = vpack.c.b16 %v421, %v420
  %v437 = vpack.c.b16 %v423, %v422
  %v438 = vpack.c.b16 %v425, %v424
  %v439 = vpack.c.b16 %v427, %v426
  %v440 = vpack.c.b16 %v429, %v428
  %v441 = vpack.c.b16 %v431, %v430
  %v442 = vpack.c.b16 %v433, %v432
  %v443 = vpack.c.b16 %v435, %v434
  %452 = vmatprep.subr.bf16.mxu0 0
  %453 = vmatpush1.bf16.msra.mxu0 %v332
  %454 = vmatprep.subr.bf16.mxu0 0
  %455 = vmatpush1.bf16.msra.mxu0 %v333
  %456 = vmatprep.subr.bf16.mxu0 0
  %457 = vmatpush1.bf16.msra.mxu0 %v334
  %458 = vmatprep.subr.bf16.mxu0 0
  %459 = vmatpush1.bf16.msra.mxu0 %v335
  %460 = vmatprep.subr.bf16.mxu0 0
  %461 = vmatpush1.bf16.msra.mxu0 %v336
  %462 = vmatprep.subr.bf16.mxu0 0
  %463 = vmatpush1.bf16.msra.mxu0 %v337
  %464 = vmatprep.subr.bf16.mxu0 0
  %465 = vmatpush1.bf16.msra.mxu0 %v338
  %466 = vmatprep.subr.bf16.mxu0 0
  %467 = vmatpush1.bf16.msra.mxu0 %v339
  %468 = vmatprep.subr.bf16.mxu0 0
  %469 = vmatpush1.bf16.msra.mxu0 0
  %470 = vmatprep.subr.bf16.mxu0 0
  %471 = vmatpush1.bf16.msra.mxu0 0
  %472 = vmatprep.subr.bf16.mxu0 0
  %473 = vmatpush1.bf16.msra.mxu0 0
  %474 = vmatprep.subr.bf16.mxu0 0
  %475 = vmatpush1.bf16.msra.mxu0 0
  %476 = vmatprep.subr.bf16.mxu0 0
  %477 = vmatpush1.bf16.msra.mxu0 0
  %478 = vmatprep.subr.bf16.mxu0 0
  %479 = vmatpush1.bf16.msra.mxu0 0
  %480 = vmatprep.subr.bf16.mxu0 0
  %481 = vmatpush1.bf16.msra.mxu0 0
  %482 = vmatprep.subr.bf16.mxu0 0
  %483 = vmatpush1.bf16.msra.mxu0 0
  %484 = vmatprep.mubr.bf16.mxu0 0
  %485 = vmatmul.mubr.bf16.gmra.mrb[0].mxu0 %v436
  %v486 = vpop.f32.mrb[0].mxu0
  %v487 = vadd.f32 %v342, %v486
  %v488 = vpop.f32.mrb[0].mxu0
  %v489 = vpop.f32.mrb[0].mxu0
  %v490 = vadd.f32 %v346, %v489
  %v491 = vpop.f32.mrb[0].mxu0
  %492 = vmatprep.mubr.bf16.mxu0 0
  %493 = vmatmul.mubr.bf16.gmra.mrb[0].mxu0 %v437
  %v494 = vpop.f32.mrb[0].mxu0
  %v495 = vadd.f32 %v350, %v494
  %v496 = vpop.f32.mrb[0].mxu0
  %v497 = vpop.f32.mrb[0].mxu0
  %v498 = vadd.f32 %v354, %v497
  %v499 = vpop.f32.mrb[0].mxu0
  %500 = vmatprep.mubr.bf16.mxu0 0
  %501 = vmatmul.mubr.bf16.gmra.mrb[0].mxu0 %v438
  %v502 = vpop.f32.mrb[0].mxu0
  %v503 = vadd.f32 %v358, %v502
  %v504 = vpop.f32.mrb[0].mxu0
  %v505 = vpop.f32.mrb[0].mxu0
  %v506 = vadd.f32 %v362, %v505
  %v507 = vpop.f32.mrb[0].mxu0
  %508 = vmatprep.mubr.bf16.mxu0 0
  %509 = vmatmul.mubr.bf16.gmra.mrb[0].mxu0 %v439
  %v510 = vpop.f32.mrb[0].mxu0
  %v511 = vadd.f32 %v366, %v510
  %v512 = vpop.f32.mrb[0].mxu0
  %v513 = vpop.f32.mrb[0].mxu0
  %v514 = vadd.f32 %v370, %v513
  %v515 = vpop.f32.mrb[0].mxu0
  %516 = vmatprep.mubr.bf16.mxu0 0
  %517 = vmatmul.mubr.bf16.gmra.mrb[0].mxu0 %v440
  %v518 = vpop.f32.mrb[0].mxu0
  %v519 = vadd.f32 %v374, %v518
  %v520 = vpop.f32.mrb[0].mxu0
  %v521 = vpop.f32.mrb[0].mxu0
  %v522 = vadd.f32 %v378, %v521
  %v523 = vpop.f32.mrb[0].mxu0
  %524 = vmatprep.mubr.bf16.mxu0 0
  %525 = vmatmul.mubr.bf16.gmra.mrb[0].mxu0 %v441
  %v526 = vpop.f32.mrb[0].mxu0
  %v527 = vadd.f32 %v382, %v526
  %v528 = vpop.f32.mrb[0].mxu0
  %v529 = vpop.f32.mrb[0].mxu0
  %v530 = vadd.f32 %v386, %v529
  %v531 = vpop.f32.mrb[0].mxu0
  %532 = vmatprep.mubr.bf16.mxu0 0
  %533 = vmatmul.mubr.bf16.gmra.mrb[0].mxu0 %v442
  %v534 = vpop.f32.mrb[0].mxu0
  %v535 = vadd.f32 %v390, %v534
  %v536 = vpop.f32.mrb[0].mxu0
  %v537 = vpop.f32.mrb[0].mxu0
  %v538 = vadd.f32 %v394, %v537
  %v539 = vpop.f32.mrb[0].mxu0
  %540 = vmatprep.mubr.bf16.mxu0 0
  %541 = vmatmul.mubr.bf16.gmra.mrb[0].mxu0 %v443
  %v542 = vpop.f32.mrb[0].mxu0
  %v543 = vadd.f32 %v398, %v542
  %v544 = vpop.f32.mrb[0].mxu0
  %v545 = vpop.f32.mrb[0].mxu0
  %v546 = vadd.f32 %v402, %v545
  %v547 = vpop.f32.mrb[0].mxu0
  %548 = vdwg.mxu0
  %v549 = vtanh.pop %v487
  %v550 = vtanh.pop %v490
  %v551 = vtanh.pop %v495
  %v552 = vtanh.pop %v498
  %v553 = vtanh.pop %v503
  %v554 = vtanh.pop %v506
  %v555 = vtanh.pop %v511
  %v556 = vtanh.pop %v514
  %v557 = vtanh.pop %v519
  %v558 = vtanh.pop %v522
  %v559 = vtanh.pop %v527
  %v560 = vtanh.pop %v530
  %v561 = vtanh.pop %v535
  %v562 = vtanh.pop %v538
  %v563 = vtanh.pop %v543
  %v564 = vtanh.pop %v546
  %565 = vset.pattern.permute.xlu0 2
  %566 = vperm.xlu0 %565, %v42
  %v567 = vpop.permute.xlu0 %566
  %569 = vset.pattern.permute.xlu0 2
  %570 = vperm.xlu0 %569, %v43
  %v571 = vpop.permute.xlu0 %570
  %573 = vset.pattern.permute.xlu0 2
  %574 = vperm.xlu0 %573, %v44
  %v575 = vpop.permute.xlu0 %574
  %577 = vset.pattern.permute.xlu0 2
  %578 = vperm.xlu0 %577, %v45
  %v579 = vpop.permute.xlu0 %578
  %581 = vset.pattern.permute.xlu0 2
  %582 = vperm.xlu0 %581, %v46
  %v583 = vpop.permute.xlu0 %582
  %585 = vset.pattern.permute.xlu0 2
  %586 = vperm.xlu0 %585, %v47
  %v587 = vpop.permute.xlu0 %586
  %589 = vset.pattern.permute.xlu0 2
  %590 = vperm.xlu0 %589, %v48
  %v591 = vpop.permute.xlu0 %590
  %593 = vset.pattern.permute.xlu0 2
  %594 = vperm.xlu0 %593, %v49
  %v595 = vpop.permute.xlu0 %594
  %597 = vset.pattern.permute.xlu0 2
  %598 = vperm.xlu0 %597, %v50
  %v599 = vpop.permute.xlu0 %598
  %601 = vset.pattern.permute.xlu0 2
  %602 = vperm.xlu0 %601, %v51
  %v603 = vpop.permute.xlu0 %602
  %605 = vset.pattern.permute.xlu0 2
  %606 = vperm.xlu0 %605, %v52
  %v607 = vpop.permute.xlu0 %606
  %609 = vset.pattern.permute.xlu0 2
  %610 = vperm.xlu0 %609, %v53
  %v611 = vpop.permute.xlu0 %610
  %613 = vset.pattern.permute.xlu0 2
  %614 = vperm.xlu0 %613, %v54
  %v615 = vpop.permute.xlu0 %614
  %617 = vset.pattern.permute.xlu0 2
  %618 = vperm.xlu0 %617, %v55
  %v619 = vpop.permute.xlu0 %618
  %621 = vset.pattern.permute.xlu0 2
  %622 = vperm.xlu0 %621, %v56
  %v623 = vpop.permute.xlu0 %622
  %625 = vset.pattern.permute.xlu0 2
  %626 = vperm.xlu0 %625, %v57
  %v627 = vpop.permute.xlu0 %626
  %v629 = vmul.f32 %v549, %v567
  %v630 = vmul.f32 %v550, %v571
  %v631 = vmul.f32 %v551, %v575
  %v632 = vmul.f32 %v552, %v579
  %v633 = vmul.f32 %v553, %v583
  %v634 = vmul.f32 %v554, %v587
  %v635 = vmul.f32 %v555, %v591
  %v636 = vmul.f32 %v556, %v595
  %v637 = vmul.f32 %v557, %v599
  %v638 = vmul.f32 %v558, %v603
  %v639 = vmul.f32 %v559, %v607
  %v640 = vmul.f32 %v560, %v611
  %v641 = vmul.f32 %v561, %v615
  %v642 = vmul.f32 %v562, %v619
  %v643 = vmul.f32 %v563, %v623
  %v644 = vmul.f32 %v564, %v627
  %v645 = vadd.f32 %v629, %v630
  %v646 = vadd.f32 %v645, %v631
  %v647 = vadd.f32 %v646, %v632
  %v648 = vadd.f32 %v647, %v633
  %v649 = vadd.f32 %v648, %v634
  %v650 = vadd.f32 %v649, %v635
  %v651 = vadd.f32 %v650, %v636
  %v652 = vadd.f32 %v651, %v637
  %v653 = vadd.f32 %v652, %v638
  %v654 = vadd.f32 %v653, %v639
  %v655 = vadd.f32 %v654, %v640
  %v656 = vadd.f32 %v655, %v641
  %v657 = vadd.f32 %v656, %v642
  %v658 = vadd.f32 %v657, %v643
  %v659 = vadd.f32 %v658, %v644
  %v660 = vrot.slane %v659, 4
  %v661 = vadd.f32 %v659, %v660
  %v662 = vrot.slane %v661, 2
  %v663 = vadd.f32 %v661, %v662
  %v664 = vrot.slane %v663, 1
  %v665 = vadd.f32 %v663, %v664
  %667 = vset.pattern.permute.xlu0 3
  %668 = vperm.xlu0 %667, %v58
  %v669 = vpop.permute.xlu0 %668
  %v671 = vadd.f32 %v665, %v669
  %672 = vst [vmem:[%s4] sm:$0x1] %v671
  // Predicated region
  $region18: #{critic_forward.1} parent=0 // pred_check
    _
  $region19: #{critic_forward.1} parent=0 // pred_check_branch
    %674 = sbr.rel (0) target = $region21
  $region20: #{critic_forward.1} parent=0 // pred_region
    _
  $region21: #{critic_forward.1} parent=0 // pred_fallthru
    _
  // Predicated region
  $region22: #{critic_forward.1} parent=0 // pred_check
    _
  $region23: #{critic_forward.1} parent=0 // pred_check_branch
    %676 = sbr.rel (0) target = $region25
  $region24: #{critic_forward.1} parent=0 // pred_region
    _
  $region25: #{critic_forward.1} parent=0 // pred_fallthru
    _

</llo_original>
